<compile_context>
chip_gen: v7x
topology: tpu7x:2x2x1
jax: 0.10.0
libtpu: 0.0.40
codegen_flags: <defaults>
</compile_context>

<pallas_src>
import functools
import numpy as np
import jax
import jax.numpy as jnp
from jax.experimental import pallas as pl
from jax.experimental.pallas import tpu as pltpu

# ---------------- static configuration ----------------
ZC_DIM = 32          # zc_dim
ZD_DIM = 8           # zd_dim == d  (also the FF hidden width, per CondKernel.__init__)
K = 4                # args.cond_modes
USE_TANH = True      # args.use_tanh
LN_EPS = 1e-5        # nn.LayerNorm default eps (must stay > 0: padded rows have var == 0)
LOGC = float(-ZD_DIM / 2.0 * np.log(2.0 * np.pi))

_D = ZD_DIM
_KD = K * _D                        # 32
_HID = _D                           # per-head FF hidden width
_NHEAD = 4
_HID_ALL = _NHEAD * _HID            # 32

# strict-lower-triangle (k, i, j) index list -> compact tri layout (112 columns)
_TRI_IDX = [(k, i, j) for k in range(K) for i in range(_D) for j in range(i)]
_TRI_COLS = [k * _D * _D + i * _D + j for (k, i, j) in _TRI_IDX]
_NTRI = len(_TRI_IDX)               # 112

# fused second-layer output layout (tri aligned to the 128-lane tile boundary)
_OFF_MU = 0                         # (z_d - mu), K*d columns
_OFF_LV = _KD                       # 32
_OFF_WT = 2 * _KD                   # 64
_OFF_TR = 128                       # compact tri, 112 columns
_TOTAL_OUT = _OFF_TR + _NTRI        # 240


def _round_up(x, m):
    return ((x + m - 1) // m) * m


def _build_constants():
    """R: replicate z per (k,i,j<i); S: sum back to (k,i); BS2: fused [-0.5*sum ; sum] per k."""
    R = np.zeros((_KD, _NTRI), np.float32)
    S = np.zeros((_NTRI, _KD), np.float32)
    for c, (k, i, j) in enumerate(_TRI_IDX):
        R[k * _D + j, c] = 1.0
        S[c, k * _D + i] = 1.0
    BS = np.zeros((_KD, K), np.float32)
    for k in range(K):
        BS[k * _D:(k + 1) * _D, k] = 1.0
    BS2 = np.concatenate([-0.5 * BS, BS], axis=0)      # (64, K), exact in bf16
    return R, S, BS2


_R_NP, _S_NP, _BS2_NP = _build_constants()


# ---------------- Pallas kernel ----------------
def _cond_kernel(z_c_ref, z_d_ref, w1_ref, b1_ref, w2_ref, b2_ref,
                 r_ref, s_ref, bs2_ref, out_ref, *, tb, b_total):
    zc = z_c_ref[...]                                   # (tb, 32) f32
    zd = z_d_ref[...]                                   # (tb, 8)  f32

    # Shared LayerNorm (gamma/beta already folded into W1/B1 on the host).
    # Padded rows have var == 0; LN_EPS > 0 keeps rsqrt finite (they are masked below).
    mean = jnp.mean(zc, axis=-1, keepdims=True)
    var0 = jnp.mean((zc - mean) ** 2, axis=-1, keepdims=True)
    xhat = ((zc - mean) * jax.lax.rsqrt(var0 + LN_EPS)).astype(jnp.bfloat16)

    # Fused FF stack: one (32x32) first-layer matmul, relu, then one (40x240) second-layer
    # matmul whose LHS is [relu(h) | z_d]; the mu block emits (z_d - mu) directly.
    h = jnp.dot(xhat, w1_ref[...], preferred_element_type=jnp.float32) + b1_ref[...]
    h = jnp.maximum(h, 0.0)                             # relu (dropout p=0 is identity)
    lhs2 = jnp.concatenate([h.astype(jnp.bfloat16), zd.astype(jnp.bfloat16)], axis=-1)
    y = jnp.dot(lhs2, w2_ref[...], preferred_element_type=jnp.float32) + b2_ref[...]   # (tb, 240)

    zdiff = y[:, _OFF_MU:_OFF_MU + _KD]                 # (tb, K*d) == z_d - mu
    lv = y[:, _OFF_LV:_OFF_LV + _KD]                    # (tb, K*d)
    wt = y[:, _OFF_WT:_OFF_WT + K]                      # (tb, K)
    tr = y[:, _OFF_TR:_OFF_TR + _NTRI]                  # (tb, 112) compact strict-lower-tri

    if USE_TANH:
        lv = jnp.tanh(lv)
        ld = lv                                         # log(exp(lv)+1e-8) == lv (exp(lv) >= e^-1)
    else:
        ld = jnp.log(jnp.exp(lv) + 1e-8)                # guard: shortcut only valid under tanh

    var_all = jnp.exp(lv)                               # (tb, K*d)
    zk = var_all * zdiff                                # (tb, K*d)

    # z += tril(tri, -1) @ z for all K at once: replicate -> elementwise -> sum-back.
    zrep = jnp.dot(zk.astype(jnp.bfloat16), r_ref[...],
                   preferred_element_type=jnp.float32)                  # (tb, 112)
    zadd = jnp.dot((tr * zrep).astype(jnp.bfloat16), s_ref[...],
                   preferred_element_type=jnp.float32)                  # (tb, K*d)
    zk = zk + zadd

    # log_softmax over the K mixture components.
    wmax = jnp.max(wt, axis=-1, keepdims=True)
    logw = wt - wmax - jnp.log(jnp.sum(jnp.exp(wt - wmax), axis=-1, keepdims=True))

    # Fused (-0.5 * sum(z^2) + sum(logdet)) per component: single tiny matmul.
    feat = jnp.concatenate([zk * zk, ld], axis=-1).astype(jnp.bfloat16)  # (tb, 64)
    lp = jnp.dot(feat, bs2_ref[...], preferred_element_type=jnp.float32) + logw   # (tb, K)

    m = jnp.max(lp, axis=-1, keepdims=True)
    lse = m + jnp.log(jnp.sum(jnp.exp(lp - m), axis=-1, keepdims=True))  # (tb, 1)
    neg = -(LOGC + lse)                                                  # (tb, 1)

    # Mask padded rows so the partial sum (and hence the mean) is exact.
    row = pl.program_id(0) * tb + jax.lax.broadcasted_iota(jnp.int32, (tb, 1), 0)
    neg = jnp.where(row < b_total, neg, 0.0)
    part = jnp.sum(neg)                                 # scalar partial sum for this batch block

    # Lane-dense (8,128) output slab: broadcast the partial everywhere (host reads one element).
    out_ref[...] = jnp.broadcast_to(part, (8, 128))


# ---------------- host-side parameter folding / fusing ----------------
def _fold_and_fuse(p_mu, p_lv, p_wt, p_tr):
    """Fold LN gamma/beta into the first Linear; fuse the four heads; fold the tri mask,
    the mu negation and the z_d replication into the second-layer weights."""
    heads = [p_mu, p_lv, p_wt, p_tr]
    w1_cols, b1_cols, w2s, b2s = [], [], [], []
    for p in heads:
        g, be, w1, b1, w2, b2 = [np.asarray(x, np.float32) for x in p]
        w1_cols.append(g.reshape(-1, 1) * w1)           # diag(gamma) @ W1
        b1_cols.append(be @ w1 + b1)                    # beta @ W1 + b1
        w2s.append(w2)
        b2s.append(b2)
    W1 = np.concatenate(w1_cols, axis=1)                # (32, 32)
    B1 = np.concatenate(b1_cols, axis=1)                # (1, 32)

    W2 = np.zeros((_HID_ALL + _D, _TOTAL_OUT), np.float32)   # rows: [hidden (32) | z_d (8)]
    B2 = np.zeros((1, _TOTAL_OUT), np.float32)
    # mu head (hidden rows 0:8): negated; z_d rows carry a +1 replication block -> (z_d - mu).
    W2[0:_HID, _OFF_MU:_OFF_MU + _KD] = -w2s[0]
    B2[:, _OFF_MU:_OFF_MU + _KD] = -b2s[0]
    for k in range(K):
        for j in range(_D):
            W2[_HID_ALL + j, _OFF_MU + k * _D + j] = 1.0
    # logvar head (hidden rows 8:16).
    W2[_HID:2 * _HID, _OFF_LV:_OFF_LV + _KD] = w2s[1]
    B2[:, _OFF_LV:_OFF_LV + _KD] = b2s[1]
    # weight head (hidden rows 16:24).
    W2[2 * _HID:3 * _HID, _OFF_WT:_OFF_WT + K] = w2s[2]
    B2[:, _OFF_WT:_OFF_WT + K] = b2s[2]
    # tri head (hidden rows 24:32), strict-lower-triangle columns only (mask folded in).
    W2[3 * _HID:4 * _HID, _OFF_TR:_OFF_TR + _NTRI] = w2s[3][:, _TRI_COLS]
    B2[:, _OFF_TR:_OFF_TR + _NTRI] = b2s[3][:, _TRI_COLS]

    # bf16 weights (single-pass MXU, halved footprint); biases stay f32 (added post-accumulate).
    return (jnp.asarray(W1, jnp.bfloat16), jnp.asarray(B1, jnp.float32),
            jnp.asarray(W2, jnp.bfloat16), jnp.asarray(B2, jnp.float32))


# ---------------- wrapper ----------------
def cond_kernel_forward(z_c, z_d, p_mu, p_lv, p_wt, p_tr, block_b=1024):
    # block_b=1024 amortizes the ~0.35us per-grid-step overhead; VMEM footprint at tb=1024 is
    # only a few MiB (fits every generation's default scoped VMEM, incl. v5e's 16 MiB).
    B = z_c.shape[0]
    W1, B1, W2, B2 = _fold_and_fuse(p_mu, p_lv, p_wt, p_tr)
    Rm = jnp.asarray(_R_NP, jnp.bfloat16)               # 0/1 constants are exact in bf16
    Sm = jnp.asarray(_S_NP, jnp.bfloat16)
    BS2 = jnp.asarray(_BS2_NP, jnp.bfloat16)

    # Choose tb so the grid has >= 2 blocks whenever B > 8 (keeps both v7x TCs busy under
    # "parallel" semantics), capped by block_b and rounded to the sublane multiple of 8.
    half = -(-B // 2)
    tb = int(min(block_b, _round_up(half, 8)))
    tb = max(8, (tb // 8) * 8)
    b_pad = _round_up(B, tb)
    nblk = b_pad // tb

    if b_pad != B:
        z_c = jnp.pad(z_c, ((0, b_pad - B), (0, 0)))
        z_d = jnp.pad(z_d, ((0, b_pad - B), (0, 0)))

    kernel = functools.partial(_cond_kernel, tb=tb, b_total=B)

    grid_spec = pltpu.PrefetchScalarGridSpec(
        num_scalar_prefetch=0,
        grid=(nblk,),
        in_specs=[
            pl.BlockSpec((tb, ZC_DIM), lambda i: (i, 0)),   # streamed per batch block
            pl.BlockSpec((tb, ZD_DIM), lambda i: (i, 0)),   # streamed per batch block
            pl.BlockSpec(W1.shape, lambda i: (0, 0)),       # VMEM-resident weights/constants
            pl.BlockSpec(B1.shape, lambda i: (0, 0)),
            pl.BlockSpec(W2.shape, lambda i: (0, 0)),
            pl.BlockSpec(B2.shape, lambda i: (0, 0)),
            pl.BlockSpec(Rm.shape, lambda i: (0, 0)),
            pl.BlockSpec(Sm.shape, lambda i: (0, 0)),
            pl.BlockSpec(BS2.shape, lambda i: (0, 0)),
        ],
        out_specs=pl.BlockSpec((8, 128), lambda i: (i, 0)),
    )

    partials = pl.pallas_call(
        kernel,
        out_shape=jax.ShapeDtypeStruct((8 * nblk, 128), jnp.float32),
        grid_spec=grid_spec,
        compiler_params=pltpu.CompilerParams(dimension_semantics=("parallel",)),
    )(z_c, z_d, W1, B1, W2, B2, Rm, Sm, BS2)

    # Each block broadcast its partial over its (8,128) slab; read one element per block.
    return jnp.sum(partials[::8, 0]) / B


# ---------------- parameter init (mirrors per-head FF modules) ----------------
def init_ff_params(key, dim_in, dim_hidden, dim_out):
    k1, k2, k3, k4 = jax.random.split(key, 4)
    gamma = jnp.ones((1, dim_in), jnp.float32)           # LayerNorm default init
    beta = jnp.zeros((1, dim_in), jnp.float32)
    w1 = jax.random.normal(k1, (dim_in, dim_hidden), jnp.float32) / np.sqrt(dim_in)
    b1 = jax.random.normal(k2, (1, dim_hidden), jnp.float32) * 0.05
    w2 = jax.random.normal(k3, (dim_hidden, dim_out), jnp.float32) / np.sqrt(dim_hidden)
    b2 = jax.random.normal(k4, (1, dim_out), jnp.float32) * 0.05
    return (gamma, beta, w1, b1, w2, b2)


# ---------------- pure-JAX reference (mirrors the PyTorch code) ----------------
def _ff_ref(x, p):
    g, b, w1, b1, w2, b2 = p
    mean = jnp.mean(x, -1, keepdims=True)
    var = jnp.mean((x - mean) ** 2, -1, keepdims=True)
    h = (x - mean) * jax.lax.rsqrt(var + LN_EPS) * g + b
    h = jnp.maximum(h @ w1 + b1, 0.0)
    return h @ w2 + b2


def cond_kernel_ref(z_c, z_d, p_mu, p_lv, p_wt, p_tr):
    B, d = z_c.shape[0], ZD_DIM
    zd3 = z_d[:, None, :]
    w = jax.nn.log_softmax(_ff_ref(z_c, p_wt), axis=-1)
    mu = _ff_ref(z_c, p_mu).reshape(B, K, d)
    lv = _ff_ref(z_c, p_lv)
    if USE_TANH:
        lv = jnp.tanh(lv)
    var = jnp.exp(lv).reshape(B, K, d)
    z = var * (zd3 - mu)
    tri = _ff_ref(z_c, p_tr).reshape(B, K, d, d)
    mask = jnp.tril(jnp.ones((d, d), jnp.float32), -1)
    z = z + jnp.einsum('bkij,bkj->bki', tri * mask, z)
    s = jnp.sum(z ** 2, -1)
    lp = -s / 2.0 + jnp.sum(jnp.log(jnp.abs(var) + 1e-8), -1) + w
    lse = jax.nn.logsumexp(lp, -1)
    return jnp.mean(-(LOGC + lse))


if __name__ == "__main__":
    key = jax.random.PRNGKey(0)
    k_zc, k_zd, k_mu, k_lv, k_wt, k_tr = jax.random.split(key, 6)

    p_mu = init_ff_params(k_mu, ZC_DIM, ZD_DIM, K * ZD_DIM)
    p_lv = init_ff_params(k_lv, ZC_DIM, ZD_DIM, K * ZD_DIM)
    p_wt = init_ff_params(k_wt, ZC_DIM, ZD_DIM, K)
    p_tr = init_ff_params(k_tr, ZC_DIM, ZD_DIM, K * ZD_DIM * ZD_DIM)

    # Small single-block case.
    B = 8
    z_c = jax.random.normal(k_zc, (B, ZC_DIM), jnp.float32)
    z_d = jax.random.normal(k_zd, (B, ZD_DIM), jnp.float32)
    out = cond_kernel_forward(z_c, z_d, p_mu, p_lv, p_wt, p_tr)
    jax.block_until_ready(out)
    ref = cond_kernel_ref(z_c, z_d, p_mu, p_lv, p_wt, p_tr)
    np.testing.assert_allclose(np.asarray(out), np.asarray(ref), rtol=2e-2, atol=2e-2)

    # Multi-block case with a padded remainder (exercises the grid + row masking).
    B2 = 20
    z_c2 = jax.random.normal(jax.random.PRNGKey(1), (B2, ZC_DIM), jnp.float32)
    z_d2 = jax.random.normal(jax.random.PRNGKey(2), (B2, ZD_DIM), jnp.float32)
    out2 = cond_kernel_forward(z_c2, z_d2, p_mu, p_lv, p_wt, p_tr)
    jax.block_until_ready(out2)
    ref2 = cond_kernel_ref(z_c2, z_d2, p_mu, p_lv, p_wt, p_tr)
    np.testing.assert_allclose(np.asarray(out2), np.asarray(ref2), rtol=2e-2, atol=2e-2)

    print("KERNEL_OK")
</pallas_src>

<mosaic_0001>
module attributes {stable_mosaic.version = 11 : i64} {
  func.func @_cond_kernel(%arg0: i32, %arg1: memref<8x32xf32, #tpu.memory_space<vmem>>, %arg2: memref<8x8xf32, #tpu.memory_space<vmem>>, %arg3: memref<32x32xbf16, #tpu.memory_space<vmem>>, %arg4: memref<1x32xf32, #tpu.memory_space<vmem>>, %arg5: memref<40x240xbf16, #tpu.memory_space<vmem>>, %arg6: memref<1x240xf32, #tpu.memory_space<vmem>>, %arg7: memref<32x112xbf16, #tpu.memory_space<vmem>>, %arg8: memref<112x32xbf16, #tpu.memory_space<vmem>>, %arg9: memref<64x4xbf16, #tpu.memory_space<vmem>>, %arg10: memref<8x128xf32, #tpu.memory_space<vmem>>) attributes {dimension_semantics = [#tpu.dimension_semantics<parallel>], iteration_bounds = array<i64: 1>, scalar_prefetch = 0 : i64, scratch_operands = 0 : i64, tpu.core_type = #tpu.core_type<tc>, window_params = [{transform_indices = @transform_0, window_bounds = array<i64: 8, 32>}, {transform_indices = @transform_1, window_bounds = array<i64: 8, 8>}, {pipeline_mode = #tpu.pipeline_mode<synchronous>, transform_indices = @transform_2, window_bounds = array<i64: 32, 32>}, {pipeline_mode = #tpu.pipeline_mode<synchronous>, transform_indices = @transform_3, window_bounds = array<i64: 1, 32>}, {pipeline_mode = #tpu.pipeline_mode<synchronous>, transform_indices = @transform_4, window_bounds = array<i64: 40, 240>}, {pipeline_mode = #tpu.pipeline_mode<synchronous>, transform_indices = @transform_5, window_bounds = array<i64: 1, 240>}, {pipeline_mode = #tpu.pipeline_mode<synchronous>, transform_indices = @transform_6, window_bounds = array<i64: 32, 112>}, {pipeline_mode = #tpu.pipeline_mode<synchronous>, transform_indices = @transform_7, window_bounds = array<i64: 112, 32>}, {pipeline_mode = #tpu.pipeline_mode<synchronous>, transform_indices = @transform_8, window_bounds = array<i64: 64, 4>}, {transform_indices = @transform_9, window_bounds = array<i64: 8, 128>}]} {
    %c0 = arith.constant 0 : index
    %c0_0 = arith.constant 0 : index
    %0 = vector.load %arg1[%c0, %c0_0] : memref<8x32xf32, #tpu.memory_space<vmem>>, vector<8x32xf32>
    %c0_1 = arith.constant 0 : index
    %c0_2 = arith.constant 0 : index
    %1 = vector.load %arg2[%c0_1, %c0_2] : memref<8x8xf32, #tpu.memory_space<vmem>>, vector<8x8xf32>
    %cst = arith.constant dense<0.000000e+00> : vector<8xf32>
    %2 = vector.multi_reduction <add>, %0, %cst [1] : vector<8x32xf32> to vector<8xf32>
    %3 = vector.shape_cast %2 : vector<8xf32> to vector<8x1xf32>
    %cst_3 = arith.constant 3.200000e+01 : f32
    %4 = vector.broadcast %cst_3 : f32 to vector<8x1xf32>
    %5 = arith.divf %3, %4 : vector<8x1xf32>
    %6 = vector.broadcast %5 : vector<8x1xf32> to vector<8x32xf32>
    %7 = arith.subf %0, %6 : vector<8x32xf32>
    %8 = arith.mulf %7, %7 : vector<8x32xf32>
    %cst_4 = arith.constant dense<0.000000e+00> : vector<8xf32>
    %9 = vector.multi_reduction <add>, %8, %cst_4 [1] : vector<8x32xf32> to vector<8xf32>
    %10 = vector.shape_cast %9 : vector<8xf32> to vector<8x1xf32>
    %cst_5 = arith.constant 3.200000e+01 : f32
    %11 = vector.broadcast %cst_5 : f32 to vector<8x1xf32>
    %12 = arith.divf %10, %11 : vector<8x1xf32>
    %13 = vector.broadcast %5 : vector<8x1xf32> to vector<8x32xf32>
    %14 = arith.subf %0, %13 : vector<8x32xf32>
    %cst_6 = arith.constant 9.99999974E-6 : f32
    %15 = vector.broadcast %cst_6 : f32 to vector<8x1xf32>
    %16 = arith.addf %12, %15 : vector<8x1xf32>
    %17 = math.rsqrt %16 : vector<8x1xf32>
    %18 = vector.broadcast %17 : vector<8x1xf32> to vector<8x32xf32>
    %19 = arith.mulf %14, %18 : vector<8x32xf32>
    %20 = arith.truncf %19 : vector<8x32xf32> to vector<8x32xbf16>
    %c0_7 = arith.constant 0 : index
    %c0_8 = arith.constant 0 : index
    %21 = vector.load %arg3[%c0_7, %c0_8] : memref<32x32xbf16, #tpu.memory_space<vmem>>, vector<32x32xbf16>
    %cst_9 = arith.constant dense<0.000000e+00> : vector<8x32xf32>
    %22 = tpu.matmul %20, %21, %cst_9 {dimension_numbers = #tpu.dot_dimension_numbers<[1], [0], [0], [1], [0, 0, 1, 1], [], []>} : vector<8x32xbf16>, vector<32x32xbf16>, vector<8x32xf32> -> vector<8x32xf32>
    %c0_10 = arith.constant 0 : index
    %c0_11 = arith.constant 0 : index
    %23 = vector.load %arg4[%c0_10, %c0_11] : memref<1x32xf32, #tpu.memory_space<vmem>>, vector<1x32xf32>
    %24 = vector.broadcast %23 : vector<1x32xf32> to vector<8x32xf32>
    %25 = arith.addf %22, %24 : vector<8x32xf32>
    %cst_12 = arith.constant 0.000000e+00 : f32
    %26 = vector.broadcast %cst_12 : f32 to vector<8x32xf32>
    %27 = arith.maximumf %25, %26 : vector<8x32xf32>
    %28 = arith.truncf %27 : vector<8x32xf32> to vector<8x32xbf16>
    %29 = arith.truncf %1 : vector<8x8xf32> to vector<8x8xbf16>
    %30 = tpu.concatenate %28, %29 in 1 : vector<8x32xbf16>, vector<8x8xbf16> -> vector<8x40xbf16>
    %c0_13 = arith.constant 0 : index
    %c0_14 = arith.constant 0 : index
    %31 = vector.load %arg5[%c0_13, %c0_14] : memref<40x240xbf16, #tpu.memory_space<vmem>>, vector<40x240xbf16>
    %cst_15 = arith.constant dense<0.000000e+00> : vector<8x240xf32>
    %32 = tpu.matmul %30, %31, %cst_15 {dimension_numbers = #tpu.dot_dimension_numbers<[1], [0], [0], [1], [0, 0, 1, 1], [], []>} : vector<8x40xbf16>, vector<40x240xbf16>, vector<8x240xf32> -> vector<8x240xf32>
    %c0_16 = arith.constant 0 : index
    %c0_17 = arith.constant 0 : index
    %33 = vector.load %arg6[%c0_16, %c0_17] : memref<1x240xf32, #tpu.memory_space<vmem>>, vector<1x240xf32>
    %34 = vector.broadcast %33 : vector<1x240xf32> to vector<8x240xf32>
    %35 = arith.addf %32, %34 : vector<8x240xf32>
    %36 = vector.extract_strided_slice %35 {offsets = [0, 0], sizes = [8, 32], strides = [1, 1]} : vector<8x240xf32> to vector<8x32xf32>
    %37 = vector.extract_strided_slice %35 {offsets = [0, 32], sizes = [8, 32], strides = [1, 1]} : vector<8x240xf32> to vector<8x32xf32>
    %38 = vector.extract_strided_slice %35 {offsets = [0, 64], sizes = [8, 4], strides = [1, 1]} : vector<8x240xf32> to vector<8x4xf32>
    %39 = vector.extract_strided_slice %35 {offsets = [0, 128], sizes = [8, 112], strides = [1, 1]} : vector<8x240xf32> to vector<8x112xf32>
    %40 = math.tanh %37 : vector<8x32xf32>
    %41 = math.exp %40 : vector<8x32xf32>
    %42 = arith.mulf %41, %36 : vector<8x32xf32>
    %43 = arith.truncf %42 : vector<8x32xf32> to vector<8x32xbf16>
    %c0_18 = arith.constant 0 : index
    %c0_19 = arith.constant 0 : index
    %44 = vector.load %arg7[%c0_18, %c0_19] : memref<32x112xbf16, #tpu.memory_space<vmem>>, vector<32x112xbf16>
    %cst_20 = arith.constant dense<0.000000e+00> : vector<8x112xf32>
    %45 = tpu.matmul %43, %44, %cst_20 {dimension_numbers = #tpu.dot_dimension_numbers<[1], [0], [0], [1], [0, 0, 1, 1], [], []>} : vector<8x32xbf16>, vector<32x112xbf16>, vector<8x112xf32> -> vector<8x112xf32>
    %46 = arith.mulf %39, %45 : vector<8x112xf32>
    %47 = arith.truncf %46 : vector<8x112xf32> to vector<8x112xbf16>
    %c0_21 = arith.constant 0 : index
    %c0_22 = arith.constant 0 : index
    %48 = vector.load %arg8[%c0_21, %c0_22] : memref<112x32xbf16, #tpu.memory_space<vmem>>, vector<112x32xbf16>
    %cst_23 = arith.constant dense<0.000000e+00> : vector<8x32xf32>
    %49 = tpu.matmul %47, %48, %cst_23 {dimension_numbers = #tpu.dot_dimension_numbers<[1], [0], [0], [1], [0, 0, 1, 1], [], []>} : vector<8x112xbf16>, vector<112x32xbf16>, vector<8x32xf32> -> vector<8x32xf32>
    %50 = arith.addf %42, %49 : vector<8x32xf32>
    %cst_24 = arith.constant dense<0xFF800000> : vector<8xf32>
    %51 = vector.multi_reduction <maximumf>, %38, %cst_24 [1] : vector<8x4xf32> to vector<8xf32>
    %52 = vector.shape_cast %51 : vector<8xf32> to vector<8x1xf32>
    %53 = vector.broadcast %52 : vector<8x1xf32> to vector<8x4xf32>
    %54 = arith.subf %38, %53 : vector<8x4xf32>
    %55 = vector.broadcast %52 : vector<8x1xf32> to vector<8x4xf32>
    %56 = arith.subf %38, %55 : vector<8x4xf32>
    %57 = math.exp %56 : vector<8x4xf32>
    %cst_25 = arith.constant dense<0.000000e+00> : vector<8xf32>
    %58 = vector.multi_reduction <add>, %57, %cst_25 [1] : vector<8x4xf32> to vector<8xf32>
    %59 = vector.shape_cast %58 : vector<8xf32> to vector<8x1xf32>
    %60 = math.log %59 : vector<8x1xf32>
    %61 = vector.broadcast %60 : vector<8x1xf32> to vector<8x4xf32>
    %62 = arith.subf %54, %61 : vector<8x4xf32>
    %63 = arith.mulf %50, %50 : vector<8x32xf32>
    %64 = tpu.concatenate %63, %40 in 1 : vector<8x32xf32>, vector<8x32xf32> -> vector<8x64xf32>
    %65 = arith.truncf %64 : vector<8x64xf32> to vector<8x64xbf16>
    %c0_26 = arith.constant 0 : index
    %c0_27 = arith.constant 0 : index
    %66 = vector.load %arg9[%c0_26, %c0_27] : memref<64x4xbf16, #tpu.memory_space<vmem>>, vector<64x4xbf16>
    %cst_28 = arith.constant dense<0.000000e+00> : vector<8x4xf32>
    %67 = tpu.matmul %65, %66, %cst_28 {dimension_numbers = #tpu.dot_dimension_numbers<[1], [0], [0], [1], [0, 0, 1, 1], [], []>} : vector<8x64xbf16>, vector<64x4xbf16>, vector<8x4xf32> -> vector<8x4xf32>
    %68 = arith.addf %67, %62 : vector<8x4xf32>
    %cst_29 = arith.constant dense<0xFF800000> : vector<8xf32>
    %69 = vector.multi_reduction <maximumf>, %68, %cst_29 [1] : vector<8x4xf32> to vector<8xf32>
    %70 = vector.shape_cast %69 : vector<8xf32> to vector<8x1xf32>
    %71 = vector.broadcast %70 : vector<8x1xf32> to vector<8x4xf32>
    %72 = arith.subf %68, %71 : vector<8x4xf32>
    %73 = math.exp %72 : vector<8x4xf32>
    %cst_30 = arith.constant dense<0.000000e+00> : vector<8xf32>
    %74 = vector.multi_reduction <add>, %73, %cst_30 [1] : vector<8x4xf32> to vector<8xf32>
    %75 = vector.shape_cast %74 : vector<8xf32> to vector<8x1xf32>
    %76 = math.log %75 : vector<8x1xf32>
    %77 = arith.addf %70, %76 : vector<8x1xf32>
    %cst_31 = arith.constant -7.35150814 : f32
    %78 = vector.broadcast %cst_31 : f32 to vector<8x1xf32>
    %79 = arith.addf %78, %77 : vector<8x1xf32>
    %cst_32 = arith.constant 0.000000e+00 : f32
    %80 = vector.broadcast %cst_32 : f32 to vector<8x1xf32>
    %81 = arith.subf %80, %79 : vector<8x1xf32>
    %c8_i32 = arith.constant 8 : i32
    %82 = arith.muli %arg0, %c8_i32 : i32
    %83 = tpu.iota {dimensions = array<i32: 0>} : vector<8x1xi32>
    %84 = vector.broadcast %82 : i32 to vector<8x1xi32>
    %85 = arith.addi %84, %83 : vector<8x1xi32>
    %c8_i32_33 = arith.constant 8 : i32
    %86 = vector.broadcast %c8_i32_33 : i32 to vector<8x1xi32>
    %87 = arith.cmpi slt, %85, %86 : vector<8x1xi32>
    %cst_34 = arith.constant 0.000000e+00 : f32
    %88 = vector.broadcast %cst_34 : f32 to vector<8x1xf32>
    %89 = arith.select %87, %81, %88 : vector<8x1xi1>, vector<8x1xf32>
    %90 = vector.shape_cast %89 : vector<8x1xf32> to vector<1x8x1xf32>
    %cst_35 = arith.constant dense<0.000000e+00> : vector<1xf32>
    %91 = vector.multi_reduction <add>, %90, %cst_35 [1, 2] : vector<1x8x1xf32> to vector<1xf32>
    %92 = vector.shape_cast %91 : vector<1xf32> to vector<1x1x1xf32>
    %93 = vector.extract %92[0, 0, 0] : f32 from vector<1x1x1xf32>
    %94 = vector.broadcast %93 : f32 to vector<8x128xf32>
    %c0_36 = arith.constant 0 : index
    %c0_37 = arith.constant 0 : index
    %95 = vector.load %arg10[%c0_36, %c0_37] : memref<8x128xf32, #tpu.memory_space<vmem>>, vector<8x128xf32>
    tpu.vector_store %arg10[%c0_36, %c0_37], %94 {strides = array<i32>} : memref<8x128xf32, #tpu.memory_space<vmem>>, vector<8x128xf32>,
    return
  }
  func.func @transform_0(%arg0: i32) -> (i32, i32) {
    %c0_i32 = arith.constant 0 : i32
    %c0_i32_0 = arith.constant 0 : i32
    return %arg0, %c0_i32 : i32, i32
  }
  func.func @transform_1(%arg0: i32) -> (i32, i32) {
    %c0_i32 = arith.constant 0 : i32
    %c0_i32_0 = arith.constant 0 : i32
    return %arg0, %c0_i32 : i32, i32
  }
  func.func @transform_2(%arg0: i32) -> (i32, i32) {
    %c0_i32 = arith.constant 0 : i32
    %c0_i32_0 = arith.constant 0 : i32
    %c0_i32_1 = arith.constant 0 : i32
    return %c0_i32, %c0_i32_0 : i32, i32
  }
  func.func @transform_3(%arg0: i32) -> (i32, i32) {
    %c0_i32 = arith.constant 0 : i32
    %c0_i32_0 = arith.constant 0 : i32
    %c0_i32_1 = arith.constant 0 : i32
    return %c0_i32, %c0_i32_0 : i32, i32
  }
  func.func @transform_4(%arg0: i32) -> (i32, i32) {
    %c0_i32 = arith.constant 0 : i32
    %c0_i32_0 = arith.constant 0 : i32
    %c0_i32_1 = arith.constant 0 : i32
    return %c0_i32, %c0_i32_0 : i32, i32
  }
  func.func @transform_5(%arg0: i32) -> (i32, i32) {
    %c0_i32 = arith.constant 0 : i32
    %c0_i32_0 = arith.constant 0 : i32
    %c0_i32_1 = arith.constant 0 : i32
    return %c0_i32, %c0_i32_0 : i32, i32
  }
  func.func @transform_6(%arg0: i32) -> (i32, i32) {
    %c0_i32 = arith.constant 0 : i32
    %c0_i32_0 = arith.constant 0 : i32
    %c0_i32_1 = arith.constant 0 : i32
    return %c0_i32, %c0_i32_0 : i32, i32
  }
  func.func @transform_7(%arg0: i32) -> (i32, i32) {
    %c0_i32 = arith.constant 0 : i32
    %c0_i32_0 = arith.constant 0 : i32
    %c0_i32_1 = arith.constant 0 : i32
    return %c0_i32, %c0_i32_0 : i32, i32
  }
  func.func @transform_8(%arg0: i32) -> (i32, i32) {
    %c0_i32 = arith.constant 0 : i32
    %c0_i32_0 = arith.constant 0 : i32
    %c0_i32_1 = arith.constant 0 : i32
    return %c0_i32, %c0_i32_0 : i32, i32
  }
  func.func @transform_9(%arg0: i32) -> (i32, i32) {
    %c0_i32 = arith.constant 0 : i32
    %c0_i32_0 = arith.constant 0 : i32
    return %arg0, %c0_i32 : i32, i32
  }
}

</mosaic_0001>

<llo_original>
// kernel: tpu_custom_call.1
$region0: #{tpu_custom_call.1}
  #allocation0 [shape = 'u32[]', space=smem, size = 0x4, offset = 0x4, fixed_abs, tag = 'smem constant byte address 0x4 - core index']
  #allocation1 [shape = 'u32[144,128]{1,0:T(1,128)}', space=vmem, size = 0x12000, scoped, tag = 'internal scratch']
  %s0 = inlined_call_operand.vmem [shape: f32[8,32], index: 0, kind: input, shape index: {}]
  %s1 = inlined_call_operand.vmem [shape: f32[8,8], index: 1, kind: input, shape index: {}]
  %s2 = inlined_call_operand.vmem [shape: bf16[32,32], index: 2, kind: input, shape index: {}]
  %s3 = inlined_call_operand.vmem [shape: f32[1,32], index: 3, kind: input, shape index: {}]
  %s4 = inlined_call_operand.vmem [shape: bf16[40,240], index: 4, kind: input, shape index: {}]
  %s5 = inlined_call_operand.vmem [shape: f32[1,240], index: 5, kind: input, shape index: {}]
  %s6 = inlined_call_operand.vmem [shape: bf16[32,112], index: 6, kind: input, shape index: {}]
  %s7 = inlined_call_operand.vmem [shape: bf16[112,32], index: 7, kind: input, shape index: {}]
  %s8 = inlined_call_operand.vmem [shape: bf16[64,4], index: 8, kind: input, shape index: {}]
  %s9 = inlined_call_operand.hbm [shape: f32[8,128], index: 9, kind: output, shape index: {}]
  %s10 = sld [smem:[#allocation0]]
  $region46: #{tpu_custom_call.1} parent=0
    _
  %s12 = ssub.s32 1, %s10
  %s13 = scalar_select 0, %s12, %s10
  $region1: #{tpu_custom_call.1} parent=0
    #allocation2 [shape = 'u8[4096]{0}', space=vmem, size = 0x1000, scoped, tag = 'output window, operand 0, single buffered']
    #allocation3 [shape = 's32[1]{0}', space=sflag, size = 0x4, scoped, tag = 'scoped memory for tpu_custom_call.1']
    %14 = vsyncpa [#allocation3], 0
    // Predicated region
    $region2: #{tpu_custom_call.1} parent=1 // pred_check
      _
    $region3: #{tpu_custom_call.1} parent=1 // pred_check_branch
      %16 = sbr.rel (0) target = $region5
    $region4: #{tpu_custom_call.1} parent=1 // pred_region
      _
    $region5: #{tpu_custom_call.1} parent=1 // pred_fallthru
      _
    // Predicated region
    $region6: #{tpu_custom_call.1} parent=1 // pred_check
      _
    $region7: #{tpu_custom_call.1} parent=1 // pred_check_branch
      %18 = sbr.rel (0) target = $region9
    $region8: #{tpu_custom_call.1} parent=1 // pred_region
      _
    $region9: #{tpu_custom_call.1} parent=1 // pred_fallthru
      _
    // Predicated region
    $region10: #{tpu_custom_call.1} parent=1 // pred_check
      _
    $region11: #{tpu_custom_call.1} parent=1 // pred_check_branch
      %20 = sbr.rel (0) target = $region13
    $region12: #{tpu_custom_call.1} parent=1 // pred_region
      _
    $region13: #{tpu_custom_call.1} parent=1 // pred_fallthru
      _
    // Predicated region
    $region14: #{tpu_custom_call.1} parent=1 // pred_check
      _
    $region15: #{tpu_custom_call.1} parent=1 // pred_check_branch
      %22 = sbr.rel (0) target = $region17
    $region16: #{tpu_custom_call.1} parent=1 // pred_region
      _
    $region17: #{tpu_custom_call.1} parent=1 // pred_fallthru
      _
    // Predicated region
    $region18: #{tpu_custom_call.1} parent=1 // pred_check
      _
    $region19: #{tpu_custom_call.1} parent=1 // pred_check_branch
      %24 = sbr.rel (0) target = $region21
    $region20: #{tpu_custom_call.1} parent=1 // pred_region
      _
    $region21: #{tpu_custom_call.1} parent=1 // pred_fallthru
      _
    // Predicated region
    $region22: #{tpu_custom_call.1} parent=1 // pred_check
      _
    $region23: #{tpu_custom_call.1} parent=1 // pred_check_branch
      %26 = sbr.rel (0) target = $region25
    $region24: #{tpu_custom_call.1} parent=1 // pred_region
      _
    $region25: #{tpu_custom_call.1} parent=1 // pred_fallthru
      _
    // Predicated region
    $region26: #{tpu_custom_call.1} parent=1 // pred_check
      _
    $region27: #{tpu_custom_call.1} parent=1 // pred_check_branch
      %28 = sbr.rel (0) target = $region29
    $region28: #{tpu_custom_call.1} parent=1 // pred_region
      _
    $region29: #{tpu_custom_call.1} parent=1 // pred_fallthru
      _
    // Predicated region
    $region30: #{tpu_custom_call.1} parent=1 // pred_check
      _
    $region31: #{tpu_custom_call.1} parent=1 // pred_check_branch
      %30 = sbr.rel (0) target = $region33
    $region32: #{tpu_custom_call.1} parent=1 // pred_region
      _
    $region33: #{tpu_custom_call.1} parent=1 // pred_fallthru
      _
    // Predicated region
    $region34: #{tpu_custom_call.1} parent=1 // pred_check
      _
    $region35: #{tpu_custom_call.1} parent=1 // pred_check_branch
      %32 = sbr.rel (0) target = $region37
    $region36: #{tpu_custom_call.1} parent=1 // pred_region
      _
    $region37: #{tpu_custom_call.1} parent=1 // pred_fallthru
      _
    %v34 = vld [vmem:[%s0] sm:$0xff]
    %v35 = vld [vmem:[%s1] sm:$0xff]
    %vm36 = vcmask 261120
    %v37 = vsel %vm36, %v34, 0.0
    %38 = vadd.xlane.f32.xlu0 %v37
    %v39 = vpop.xlane.xlu0 %38
    %v40 = vrcp.pop 32.0
    %v41 = vmul.f32 %v39, %v40
    %v42 = vsub.f32 %v34, %v41
    %v43 = vmul.f32 %v42, %v42
    %v44 = vsel %vm36, %v43, 0.0
    %45 = vadd.xlane.f32.xlu0 %v44
    %v46 = vpop.xlane.xlu0 %45
    %v47 = vmul.f32 %v46, %v40
    %v48 = vadd.f32 %v47, 1e-05
    %v49 = vrsqrt.pop %v48
    %v50 = vmul.f32 %v42, %v49
    %v51 = vpack.c.bf16 %v50, %v50
    %v52 = vld [vmem:[%s2] sm:$0xf]
    %v53 = vld [vmem:[%s2 + $0x4] sm:$0xf]
    %v54 = vld [vmem:[%s2 + $0x8] sm:$0xf]
    %v55 = vld [vmem:[%s2 + $0xc] sm:$0xf]
    %v56 = vld [vmem:[%s3] sm:$0x1]
    %v58 = vlaneseq
    %v59 = vshrl.u32 %v58, 7
    %v60 = vsub.s32 0, %v59
    %v61 = vrot.slane %v56, %v60
    %v67 = vunpack.c.l.b16 %v52
    %v68 = vunpack.c.l.b16 %v53
    %v69 = vunpack.c.l.b16 %v54
    %v70 = vunpack.c.l.b16 %v55
    %v71 = vpack.c.b16 %v68, %v67
    %v72 = vpack.c.b16 %v70, %v69
    %v76 = vsel %vm36, %v51, 0
    %78 = vmatprep.subr.bf16.mxu0 0
    %79 = vmatpush1.bf16.msra.mxu0 %v71
    %80 = vmatprep.subr.bf16.mxu0 0
    %81 = vmatpush1.bf16.msra.mxu0 %v72
    %82 = vmatprep.subr.bf16.mxu0 0
    %83 = vmatpush1.bf16.msra.mxu0 0
    %84 = vmatprep.subr.bf16.mxu0 0
    %85 = vmatpush1.bf16.msra.mxu0 0
    %86 = vmatprep.subr.bf16.mxu0 0
    %87 = vmatpush1.bf16.msra.mxu0 0
    %88 = vmatprep.subr.bf16.mxu0 0
    %89 = vmatpush1.bf16.msra.mxu0 0
    %90 = vmatprep.subr.bf16.mxu0 0
    %91 = vmatpush1.bf16.msra.mxu0 0
    %92 = vmatprep.subr.bf16.mxu0 0
    %93 = vmatpush1.bf16.msra.mxu0 0
    %94 = vmatprep.subr.bf16.mxu0 0
    %95 = vmatpush1.bf16.msra.mxu0 0
    %96 = vmatprep.subr.bf16.mxu0 0
    %97 = vmatpush1.bf16.msra.mxu0 0
    %98 = vmatprep.subr.bf16.mxu0 0
    %99 = vmatpush1.bf16.msra.mxu0 0
    %100 = vmatprep.subr.bf16.mxu0 0
    %101 = vmatpush1.bf16.msra.mxu0 0
    %102 = vmatprep.subr.bf16.mxu0 0
    %103 = vmatpush1.bf16.msra.mxu0 0
    %104 = vmatprep.subr.bf16.mxu0 0
    %105 = vmatpush1.bf16.msra.mxu0 0
    %106 = vmatprep.subr.bf16.mxu0 0
    %107 = vmatpush1.bf16.msra.mxu0 0
    %108 = vmatprep.subr.bf16.mxu0 0
    %109 = vmatpush1.bf16.msra.mxu0 0
    %110 = vmatprep.mubr.bf16.mxu0 0
    %111 = vmatmul.mubr.bf16.gmra.mrb[0].mxu0 %v76
    %v112 = vpop.f32.mrb[0].mxu0
    %v113 = vadd.f32 %v61, %v112
    %v114 = vpop.f32.mrb[0].mxu0
    %v115 = vpop.f32.mrb[0].mxu0
    %v116 = vpop.f32.mrb[0].mxu0
    %117 = vdwg.mxu0
    %v118 = vmax.f32 %v113, 0.0
    %v119 = vpack.c.bf16 %v118, %v118
    %v120 = vpack.c.bf16 %v35, %v35
    %122 = vrot.lane.b32.xlu0 %v120, 32
    %v123 = vpop.permute.xlu0 %122
    %v126 = vsel %vm36, %v119, %v123
    %v127 = vld [vmem:[%s4] sm:$0xff]
    %v128 = vld [vmem:[%s4 + $0x8] sm:$0xff]
    %v129 = vld [vmem:[%s4 + $0x10] sm:$0xff]
    %v130 = vld [vmem:[%s4 + $0x18] sm:$0xff]
    %v131 = vld [vmem:[%s4 + $0x20] sm:$0xff]
    %v132 = vld [vmem:[%s5] sm:$0x3]
    %v134 = vlaneseq
    %v135 = vshrl.u32 %v134, 7
    %v136 = vsub.s32 0, %v135
    %v137 = vrot.slane %v132, %v136
    %v138 = vlaneseq
    %v139 = vshrl.u32 %v138, 7
    %v140 = vsub.s32 1, %v139
    %v141 = vrot.slane %v132, %v140
    %v149 = vunpack.c.l.b16 %v127
    %v150 = vunpack.c.h.b16 %v127
    %v151 = vunpack.c.l.b16 %v128
    %v152 = vunpack.c.h.b16 %v128
    %v153 = vunpack.c.l.b16 %v129
    %v154 = vunpack.c.h.b16 %v129
    %v155 = vunpack.c.l.b16 %v130
    %v156 = vunpack.c.h.b16 %v130
    %v157 = vunpack.c.l.b16 %v131
    %v158 = vunpack.c.h.b16 %v131
    %v159 = vpack.c.b16 %v151, %v149
    %v160 = vpack.c.b16 %v152, %v150
    %v161 = vpack.c.b16 %v155, %v153
    %v162 = vpack.c.b16 %v156, %v154
    %v163 = vpack.c.b16 %v157, %v157
    %v164 = vpack.c.b16 %v158, %v158
    %vm169 = vcmask 326656
    %v170 = vsel %vm169, %v126, 0
    %vm172 = vcmask 1043456
    %v174 = vsel %vm172, %v163, 0
    %v177 = vsel %vm172, %v164, 0
    %179 = vmatprep.subr.bf16.mxu0 %v160
    %180 = vmatpush1.bf16.msra.mxu0 %v159
    %181 = vmatprep.subr.bf16.mxu0 %v162
    %182 = vmatpush1.bf16.msra.mxu0 %v161
    %183 = vmatprep.subr.bf16.mxu0 %v177
    %184 = vmatpush1.bf16.msra.mxu0 %v174
    %185 = vmatprep.subr.bf16.mxu0 0
    %186 = vmatpush1.bf16.msra.mxu0 0
    %187 = vmatprep.subr.bf16.mxu0 0
    %188 = vmatpush1.bf16.msra.mxu0 0
    %189 = vmatprep.subr.bf16.mxu0 0
    %190 = vmatpush1.bf16.msra.mxu0 0
    %191 = vmatprep.subr.bf16.mxu0 0
    %192 = vmatpush1.bf16.msra.mxu0 0
    %193 = vmatprep.subr.bf16.mxu0 0
    %194 = vmatpush1.bf16.msra.mxu0 0
    %195 = vmatprep.subr.bf16.mxu0 0
    %196 = vmatpush1.bf16.msra.mxu0 0
    %197 = vmatprep.subr.bf16.mxu0 0
    %198 = vmatpush1.bf16.msra.mxu0 0
    %199 = vmatprep.subr.bf16.mxu0 0
    %200 = vmatpush1.bf16.msra.mxu0 0
    %201 = vmatprep.subr.bf16.mxu0 0
    %202 = vmatpush1.bf16.msra.mxu0 0
    %203 = vmatprep.subr.bf16.mxu0 0
    %204 = vmatpush1.bf16.msra.mxu0 0
    %205 = vmatprep.subr.bf16.mxu0 0
    %206 = vmatpush1.bf16.msra.mxu0 0
    %207 = vmatprep.subr.bf16.mxu0 0
    %208 = vmatpush1.bf16.msra.mxu0 0
    %209 = vmatprep.subr.bf16.mxu0 0
    %210 = vmatpush1.bf16.msra.mxu0 0
    %211 = vmatprep.mubr.bf16.mxu0 0
    %212 = vmatmul.mubr.bf16.gmra.mrb[0].mxu0 %v170
    %v213 = vpop.f32.mrb[0].mxu0
    %v214 = vadd.f32 %v137, %v213
    %v215 = vpop.f32.mrb[0].mxu0
    %v216 = vadd.f32 %v141, %v215
    %v217 = vpop.f32.mrb[0].mxu0
    %v218 = vpop.f32.mrb[0].mxu0
    %219 = vdwg.mxu0
    %v220 = vtanh.pop %v214
    %v221 = vmul.f32 %v220, 1.442695
    %v222 = vpow.pop %v221
    %224 = vrot.lane.b32.xlu0 %v214, 32
    %v225 = vpop.permute.xlu0 %224
    %v227 = vmul.f32 %v222, %v225
    %v228 = vpack.c.bf16 %v227, %v227
    %v229 = vld [vmem:[%s6] sm:$0xf]
    %v230 = vld [vmem:[%s6 + $0x4] sm:$0xf]
    %v231 = vld [vmem:[%s6 + $0x8] sm:$0xf]
    %v232 = vld [vmem:[%s6 + $0xc] sm:$0xf]
    %234 = vrot.lane.b32.xlu0 %v228, 96
    %v235 = vpop.permute.xlu0 %234
    %v240 = vunpack.c.l.b16 %v229
    %v241 = vunpack.c.l.b16 %v230
    %v242 = vunpack.c.l.b16 %v231
    %v243 = vunpack.c.l.b16 %v232
    %v244 = vpack.c.b16 %v241, %v240
    %v245 = vpack.c.b16 %v243, %v242
    %v249 = vsel %vm36, %v235, 0
    %251 = vmatprep.subr.bf16.mxu0 0
    %252 = vmatpush1.bf16.msra.mxu0 %v244
    %253 = vmatprep.subr.bf16.mxu0 0
    %254 = vmatpush1.bf16.msra.mxu0 %v245
    %255 = vmatprep.subr.bf16.mxu0 0
    %256 = vmatpush1.bf16.msra.mxu0 0
    %257 = vmatprep.subr.bf16.mxu0 0
    %258 = vmatpush1.bf16.msra.mxu0 0
    %259 = vmatprep.subr.bf16.mxu0 0
    %260 = vmatpush1.bf16.msra.mxu0 0
    %261 = vmatprep.subr.bf16.mxu0 0
    %262 = vmatpush1.bf16.msra.mxu0 0
    %263 = vmatprep.subr.bf16.mxu0 0
    %264 = vmatpush1.bf16.msra.mxu0 0
    %265 = vmatprep.subr.bf16.mxu0 0
    %266 = vmatpush1.bf16.msra.mxu0 0
    %267 = vmatprep.subr.bf16.mxu0 0
    %268 = vmatpush1.bf16.msra.mxu0 0
    %269 = vmatprep.subr.bf16.mxu0 0
    %270 = vmatpush1.bf16.msra.mxu0 0
    %271 = vmatprep.subr.bf16.mxu0 0
    %272 = vmatpush1.bf16.msra.mxu0 0
    %273 = vmatprep.subr.bf16.mxu0 0
    %274 = vmatpush1.bf16.msra.mxu0 0
    %275 = vmatprep.subr.bf16.mxu0 0
    %276 = vmatpush1.bf16.msra.mxu0 0
    %277 = vmatprep.subr.bf16.mxu0 0
    %278 = vmatpush1.bf16.msra.mxu0 0
    %279 = vmatprep.subr.bf16.mxu0 0
    %280 = vmatpush1.bf16.msra.mxu0 0
    %281 = vmatprep.subr.bf16.mxu0 0
    %282 = vmatpush1.bf16.msra.mxu0 0
    %283 = vmatprep.mubr.bf16.mxu0 0
    %284 = vmatmul.mubr.bf16.gmra.mrb[0].mxu0 %v249
    %v285 = vpop.f32.mrb[0].mxu0
    %v286 = vadd.f32 0.0, %v285
    %v287 = vpop.f32.mrb[0].mxu0
    %v288 = vpop.f32.mrb[0].mxu0
    %v289 = vpop.f32.mrb[0].mxu0
    %290 = vdwg.mxu0
    %v291 = vmul.f32 %v216, %v286
    %v292 = vpack.c.bf16 %v291, %v291
    %v293 = vld [vmem:[%s7] sm:$0xf]
    %v294 = vld [vmem:[%s7 + $0x4] sm:$0xf]
    %v295 = vld [vmem:[%s7 + $0x8] sm:$0xf]
    %v296 = vld [vmem:[%s7 + $0xc] sm:$0xf]
    %v297 = vld [vmem:[%s7 + $0x10] sm:$0xf]
    %v298 = vld [vmem:[%s7 + $0x14] sm:$0xf]
    %v299 = vld [vmem:[%s7 + $0x18] sm:$0xf]
    %v300 = vld [vmem:[%s7 + $0x1c] sm:$0xf]
    %v301 = vld [vmem:[%s7 + $0x20] sm:$0xf]
    %v302 = vld [vmem:[%s7 + $0x24] sm:$0xf]
    %v303 = vld [vmem:[%s7 + $0x28] sm:$0xf]
    %v304 = vld [vmem:[%s7 + $0x2c] sm:$0xf]
    %v305 = vld [vmem:[%s7 + $0x30] sm:$0xf]
    %v306 = vld [vmem:[%s7 + $0x34] sm:$0xf]
    %v321 = vunpack.c.l.b16 %v293
    %v322 = vunpack.c.l.b16 %v294
    %v323 = vunpack.c.l.b16 %v295
    %v324 = vunpack.c.l.b16 %v296
    %v325 = vunpack.c.l.b16 %v297
    %v326 = vunpack.c.l.b16 %v298
    %v327 = vunpack.c.l.b16 %v299
    %v328 = vunpack.c.l.b16 %v300
    %v329 = vunpack.c.l.b16 %v301
    %v330 = vunpack.c.l.b16 %v302
    %v331 = vunpack.c.l.b16 %v303
    %v332 = vunpack.c.l.b16 %v304
    %v333 = vunpack.c.l.b16 %v305
    %v334 = vunpack.c.l.b16 %v306
    %v335 = vpack.c.b16 %v322, %v321
    %v336 = vpack.c.b16 %v324, %v323
    %v337 = vpack.c.b16 %v326, %v325
    %v338 = vpack.c.b16 %v328, %v327
    %v339 = vpack.c.b16 %v330, %v329
    %v340 = vpack.c.b16 %v332, %v331
    %v341 = vpack.c.b16 %v334, %v333
    %vm349 = vcmask 916480
    %v351 = vsel %vm349, %v292, 0
    %353 = vmatprep.subr.bf16.mxu0 0
    %354 = vmatpush1.bf16.msra.mxu0 %v335
    %355 = vmatprep.subr.bf16.mxu0 0
    %356 = vmatpush1.bf16.msra.mxu0 %v336
    %357 = vmatprep.subr.bf16.mxu0 0
    %358 = vmatpush1.bf16.msra.mxu0 %v337
    %359 = vmatprep.subr.bf16.mxu0 0
    %360 = vmatpush1.bf16.msra.mxu0 %v338
    %361 = vmatprep.subr.bf16.mxu0 0
    %362 = vmatpush1.bf16.msra.mxu0 %v339
    %363 = vmatprep.subr.bf16.mxu0 0
    %364 = vmatpush1.bf16.msra.mxu0 %v340
    %365 = vmatprep.subr.bf16.mxu0 0
    %366 = vmatpush1.bf16.msra.mxu0 %v341
    %367 = vmatprep.subr.bf16.mxu0 0
    %368 = vmatpush1.bf16.msra.mxu0 0
    %369 = vmatprep.subr.bf16.mxu0 0
    %370 = vmatpush1.bf16.msra.mxu0 0
    %371 = vmatprep.subr.bf16.mxu0 0
    %372 = vmatpush1.bf16.msra.mxu0 0
    %373 = vmatprep.subr.bf16.mxu0 0
    %374 = vmatpush1.bf16.msra.mxu0 0
    %375 = vmatprep.subr.bf16.mxu0 0
    %376 = vmatpush1.bf16.msra.mxu0 0
    %377 = vmatprep.subr.bf16.mxu0 0
    %378 = vmatpush1.bf16.msra.mxu0 0
    %379 = vmatprep.subr.bf16.mxu0 0
    %380 = vmatpush1.bf16.msra.mxu0 0
    %381 = vmatprep.subr.bf16.mxu0 0
    %382 = vmatpush1.bf16.msra.mxu0 0
    %383 = vmatprep.subr.bf16.mxu0 0
    %384 = vmatpush1.bf16.msra.mxu0 0
    %385 = vmatprep.mubr.bf16.mxu0 0
    %386 = vmatmul.mubr.bf16.gmra.mrb[0].mxu0 %v351
    %v387 = vpop.f32.mrb[0].mxu0
    %v388 = vadd.f32 0.0, %v387
    %v389 = vpop.f32.mrb[0].mxu0
    %v390 = vpop.f32.mrb[0].mxu0
    %v391 = vpop.f32.mrb[0].mxu0
    %392 = vdwg.mxu0
    %394 = vrot.lane.b32.xlu0 %v388, 32
    %v395 = vpop.permute.xlu0 %394
    %v397 = vadd.f32 %v227, %v395
    %vm398 = vcmask 556544
    %v399 = vsel %vm398, %v214, -inf
    %400 = vmax.xlane.f32.xlu0 %v399
    %v401 = vpop.xlane.xlu0 %400
    %v402 = vsub.f32 %v214, %v401
    %v403 = vmul.f32 %v402, 1.442695
    %v404 = vpow.pop %v403
    %406 = vrot.lane.b32.xlu0 %v404, 64
    %v407 = vpop.permute.xlu0 %406
    %vm409 = vcmask 31744
    %v410 = vsel %vm409, %v407, 0.0
    %411 = vadd.xlane.f32.xlu0 %v410
    %v412 = vpop.xlane.xlu0 %411
    %v413 = vlog2.pop %v412
    %v414 = vmul.f32 %v413, 0.6931472
    %v415 = vsub.f32 %v402, %v414
    %v416 = vmul.f32 %v397, %v397
    %418 = vrot.lane.b32.xlu0 %v416, 96
    %v419 = vpop.permute.xlu0 %418
    %v421 = vsel %vm36, %v419, %v220
    %v422 = vpack.c.bf16 %v421, %v421
    %v423 = vld [vmem:[%s8] sm:$0xf]
    %v424 = vld [vmem:[%s8 + $0x4] sm:$0xf]
    %v425 = vld [vmem:[%s8 + $0x8] sm:$0xf]
    %v426 = vld [vmem:[%s8 + $0xc] sm:$0xf]
    %v427 = vld [vmem:[%s8 + $0x10] sm:$0xf]
    %v428 = vld [vmem:[%s8 + $0x14] sm:$0xf]
    %v429 = vld [vmem:[%s8 + $0x18] sm:$0xf]
    %v430 = vld [vmem:[%s8 + $0x1c] sm:$0xf]
    %v439 = vunpack.c.l.b16 %v423
    %v440 = vunpack.c.l.b16 %v424
    %v441 = vunpack.c.l.b16 %v425
    %v442 = vunpack.c.l.b16 %v426
    %v443 = vunpack.c.l.b16 %v427
    %v444 = vunpack.c.l.b16 %v428
    %v445 = vunpack.c.l.b16 %v429
    %v446 = vunpack.c.l.b16 %v430
    %v447 = vpack.c.b16 %v440, %v439
    %v448 = vpack.c.b16 %v442, %v441
    %v449 = vpack.c.b16 %v444, %v443
    %v450 = vpack.c.b16 %v446, %v445
    %456 = vrot.lane.b32.xlu0 %v415, 64
    %v457 = vpop.permute.xlu0 %456
    %vm459 = vcmask 523264
    %v461 = vsel %vm459, %v422, 0
    %463 = vmatprep.subr.bf16.mxu0 0
    %464 = vmatpush1.bf16.msra.mxu0 %v447
    %465 = vmatprep.subr.bf16.mxu0 0
    %466 = vmatpush1.bf16.msra.mxu0 %v448
    %467 = vmatprep.subr.bf16.mxu0 0
    %468 = vmatpush1.bf16.msra.mxu0 %v449
    %469 = vmatprep.subr.bf16.mxu0 0
    %470 = vmatpush1.bf16.msra.mxu0 %v450
    %471 = vmatprep.subr.bf16.mxu0 0
    %472 = vmatpush1.bf16.msra.mxu0 0
    %473 = vmatprep.subr.bf16.mxu0 0
    %474 = vmatpush1.bf16.msra.mxu0 0
    %475 = vmatprep.subr.bf16.mxu0 0
    %476 = vmatpush1.bf16.msra.mxu0 0
    %477 = vmatprep.subr.bf16.mxu0 0
    %478 = vmatpush1.bf16.msra.mxu0 0
    %479 = vmatprep.subr.bf16.mxu0 0
    %480 = vmatpush1.bf16.msra.mxu0 0
    %481 = vmatprep.subr.bf16.mxu0 0
    %482 = vmatpush1.bf16.msra.mxu0 0
    %483 = vmatprep.subr.bf16.mxu0 0
    %484 = vmatpush1.bf16.msra.mxu0 0
    %485 = vmatprep.subr.bf16.mxu0 0
    %486 = vmatpush1.bf16.msra.mxu0 0
    %487 = vmatprep.subr.bf16.mxu0 0
    %488 = vmatpush1.bf16.msra.mxu0 0
    %489 = vmatprep.subr.bf16.mxu0 0
    %490 = vmatpush1.bf16.msra.mxu0 0
    %491 = vmatprep.subr.bf16.mxu0 0
    %492 = vmatpush1.bf16.msra.mxu0 0
    %493 = vmatprep.subr.bf16.mxu0 0
    %494 = vmatpush1.bf16.msra.mxu0 0
    %495 = vmatprep.mubr.bf16.mxu0 0
    %496 = vmatmul.mubr.bf16.gmra.mrb[0].mxu0 %v461
    %v497 = vpop.f32.mrb[0].mxu0
    %v498 = vadd.f32 %v457, %v497
    %v499 = vpop.f32.mrb[0].mxu0
    %v500 = vpop.f32.mrb[0].mxu0
    %v501 = vpop.f32.mrb[0].mxu0
    %502 = vdwg.mxu0
    %v503 = vsel %vm409, %v498, -inf
    %504 = vmax.xlane.f32.xlu0 %v503
    %v505 = vpop.xlane.xlu0 %504
    %v506 = vsub.f32 %v498, %v505
    %v507 = vmul.f32 %v506, 1.442695
    %v508 = vpow.pop %v507
    %v509 = vsel %vm409, %v508, 0.0
    %510 = vadd.xlane.f32.xlu0 %v509
    %v511 = vpop.xlane.xlu0 %510
    %v512 = vlog2.pop %v511
    %v513 = vmul.f32 %v512, 0.6931472
    %v514 = vadd.f32 %v505, %v513
    %v515 = vadd.f32 %v514, -7.351508
    %v516 = vsub.f32 0.0, %v515
    %s517 = smul.u32 0, 8
    %v518 = vlaneseq
    %v519 = vshrl.u32 %v518, 7
    %v520 = vstv %s517
    %v521 = vadd.s32 %v520, %v519
    %vm522 = vcmp.lt.s32.totalorder %v521, 8
    %v523 = vsel %vm522, %v516, 0.0
    %vm524 = vcmask 7168
    %v525 = vsel %vm524, %v523, 0.0
    %526 = vadd.xlane.f32.xlu0 %v525
    %v527 = vpop.xlane.xlu0 %526
    %v528 = vrot.slane %v527, 4
    %v529 = vadd.f32 %v527, %v528
    %v530 = vrot.slane %v529, 2
    %v531 = vadd.f32 %v529, %v530
    %v532 = vrot.slane %v531, 1
    %v533 = vadd.f32 %v531, %v532
    %s534 = vtos %v533
    %v535 = vstv %s534
    %536 = vst [vmem:[#allocation2] sm:$0xff] %v535
    // Predicated region
    $region38: #{tpu_custom_call.1} parent=1 // pred_check
      _
    $region39: #{tpu_custom_call.1} parent=1 // pred_check_branch
      %538 = sbr.rel (0) target = $region41
    $region40: #{tpu_custom_call.1} parent=1 // pred_region
      %s540 = ssub.s32 128, 128
      %541 = vsyncadd [#allocation3], %s540
      %s543 = sshll.u32 [#allocation2], 4
      %s544 = int_to_ptr.vmem [resolvable:$true] %s543
      %546 = dma.vmem_to_hbm [thread:$0]  %s544, 128, %s9, [#allocation3]
    $region41: #{tpu_custom_call.1} parent=1 // pred_fallthru
      _
    // Predicated region
    $region42: #{tpu_custom_call.1} parent=1 // pred_check
      _
    $region43: #{tpu_custom_call.1} parent=1 // pred_check_branch
      %548 = sbr.rel (0) target = $region45
    $region44: #{tpu_custom_call.1} parent=1 // pred_region
      %549 = dma.done [#allocation3], 128
    $region45: #{tpu_custom_call.1} parent=1 // pred_fallthru
      _
    %550 = vsyncpa [#allocation3], 1

</llo_original>
